<compile_context>
chip_gen: v6e
topology: v6e:2x2x1
jax: 0.10.0
libtpu: 0.0.40
codegen_flags: <defaults>
</compile_context>

<pallas_src>
import functools

import jax
import jax.numpy as jnp
from jax.experimental import pallas as pl
from jax.experimental.pallas import tpu as pltpu

EPS = 1e-12  # matches torch.nn.functional.normalize eps


# ---------------------------------------------------------------------------
# helpers
# ---------------------------------------------------------------------------
def _l2norm(t, axis=-1):
    """Wrapper/reference-side l2norm (matches F.normalize)."""
    n = jnp.sqrt(jnp.sum(t * t, axis=axis, keepdims=True))
    return t / jnp.maximum(n, EPS)


def _row_norm(t):
    """In-kernel row l2norm via rsqrt (eps clamp on squared norm = EPS**2)."""
    ss = jnp.sum(t * t, axis=-1, keepdims=True)
    return t * jax.lax.rsqrt(jnp.maximum(ss, EPS * EPS))


def _head_norm(t, seg, seg_t):
    """Per-head l2norm of a lane-dense (N, G*dh) slab via segment matmuls."""
    ss = jnp.dot(t * t, seg, preferred_element_type=jnp.float32)        # (N, G)
    inv = jax.lax.rsqrt(jnp.maximum(ss, EPS * EPS))                     # (N, G)
    return t * jnp.dot(inv, seg_t, preferred_element_type=jnp.float32)  # (N, G*dh)


def _split_heads(x2d, n_heads, dim_head):
    """(N, n_heads*dim_head) -> (n_heads, N, dim_head), lane-aligned relayout."""
    x3 = x2d.reshape(x2d.shape[0], n_heads, dim_head)
    if hasattr(pltpu, "einshape"):          # lane-layout-aware relayout
        return pltpu.einshape("nhd->hnd", x3)
    return jnp.transpose(x3, (1, 0, 2))


def _merge_heads(x3):
    """(H, N, dh) -> (N, H*dh) lane-dense slab."""
    if hasattr(pltpu, "einshape"):
        y = pltpu.einshape("hnd->nhd", x3)
    else:
        y = jnp.transpose(x3, (1, 0, 2))
    return y.reshape(y.shape[0], y.shape[1] * y.shape[2])


def _vmem_limit_bytes():
    """~3/4 of physical VMEM, capped at 96 MiB (-> ~48 MiB on v7x)."""
    try:
        cap = int(pltpu.get_tpu_info().vmem_capacity_bytes)
        return min(cap * 3 // 4, 96 * 1024 * 1024)
    except Exception:
        return 64 * 1024 * 1024


# ---------------------------------------------------------------------------
# Pallas kernels
# ---------------------------------------------------------------------------
def _embed_kernel(patch_ref, w_ref, pos_ref, out_ref):
    # patch_ref: (1, N, Pd); w_ref: (Pd, D) bf16 (pre-normalized, transposed)
    p = patch_ref[0].astype(jnp.bfloat16)
    tok = jnp.dot(p, w_ref[...], preferred_element_type=jnp.float32)
    tok = tok + pos_ref[...]
    out_ref[0] = _row_norm(tok)


def _fused_layers_kernel(tok_ref, seg_ref, segt_ref,
                         wqkv_ref, qks_ref, woa_ref, aal_ref,
                         whg_ref, hgs_ref, wof_ref, fal_ref,
                         out_ref, state_ref,
                         *, heads, dim_head, dim_inner, ff_inner):
    layer = pl.program_id(1)
    n_layers = pl.num_programs(1)
    N = state_ref.shape[0]
    H, dh, DI, FI = heads, dim_head, dim_inner, ff_inner

    # Tokens stay resident in VMEM scratch across the whole layer axis.
    @pl.when(layer == 0)
    def _():
        state_ref[...] = tok_ref[0]

    x = state_ref[...]                                                  # (N, D) f32

    # ---------------- attention ----------------
    qkv = jnp.dot(x.astype(jnp.bfloat16), wqkv_ref[0],
                  preferred_element_type=jnp.float32)                   # (N, 3*DI)

    # q & k head-norm in a single segment-matmul pass, scales lane-dense.
    qk = _head_norm(qkv[:, :2 * DI], seg_ref[...], segt_ref[...]) * qks_ref[0]
    v2d = qkv[:, 2 * DI:]                                               # (N, DI)

    # Head-batched layout: (G, N, dh) with heads as the leading batch dim.
    qk3 = _split_heads(qk, 2 * H, dh).astype(jnp.bfloat16)              # (2H, N, dh)
    v3 = _split_heads(v2d, H, dh).astype(jnp.bfloat16)                  # (H, N, dh)
    q3 = qk3[:H]
    k3 = qk3[H:]

    # SDPA with scale=1.0, batched over heads.
    s = jnp.einsum("hnd,hmd->hnm", q3, k3,
                   preferred_element_type=jnp.float32)                  # (H, N, N)
    s = s - jnp.max(s, axis=-1, keepdims=True)
    e = jnp.exp(s)
    p = e * pl.reciprocal(jnp.sum(e, axis=-1, keepdims=True), approx=True)
    o = jnp.einsum("hnm,hmd->hnd", p.astype(jnp.bfloat16), v3,
                   preferred_element_type=jnp.float32)                  # (H, N, dh)

    merged = _merge_heads(o)                                            # (N, DI)
    attn_out = jnp.dot(merged.astype(jnp.bfloat16), woa_ref[0],
                       preferred_element_type=jnp.float32)              # (N, D)
    attn_out = _row_norm(attn_out)                                      # l2norm(attn(x))
    x = _row_norm(x + aal_ref[0] * (attn_out - x))                      # lerp (scale baked)

    # ---------------- feed-forward ----------------
    hg = jnp.dot(x.astype(jnp.bfloat16), whg_ref[0],
                 preferred_element_type=jnp.float32) * hgs_ref[0]       # (N, 2*FI)
    hidden = hg[:, :FI]
    gate = hg[:, FI:]                                                   # scale baked in
    sig = pl.reciprocal(1.0 + jnp.exp(-gate), approx=True)              # sigmoid(gate)
    act = gate * sig * hidden                                           # silu(gate)*hidden
    ff_out = jnp.dot(act.astype(jnp.bfloat16), wof_ref[0],
                     preferred_element_type=jnp.float32)                # (N, D)
    ff_out = _row_norm(ff_out)
    x = _row_norm(x + fal_ref[0] * (ff_out - x))

    state_ref[...] = x

    @pl.when(layer == n_layers - 1)
    def _():
        out_ref[0] = x


# ---------------------------------------------------------------------------
# pallas_call wrappers
# ---------------------------------------------------------------------------
def _embed_call(patches, w_et, pos_emb):
    B, N, Pd = patches.shape
    D = w_et.shape[1]
    return pl.pallas_call(
        _embed_kernel,
        out_shape=jax.ShapeDtypeStruct((B, N, D), jnp.float32),
        grid=(B,),
        in_specs=[
            pl.BlockSpec((1, N, Pd), lambda b: (b, 0, 0)),
            pl.BlockSpec((Pd, D), lambda b: (0, 0)),
            pl.BlockSpec((N, D), lambda b: (0, 0)),
        ],
        out_specs=pl.BlockSpec((1, N, D), lambda b: (b, 0, 0)),
        compiler_params=pltpu.CompilerParams(
            dimension_semantics=("parallel",),
            vmem_limit_bytes=_vmem_limit_bytes(),
        ),
    )(patches, w_et, pos_emb)


def _fused_layers_call(tokens, prep, cfg):
    B, N, D = tokens.shape
    H, dh, depth = cfg["heads"], cfg["dim_head"], cfg["depth"]
    DI = H * dh
    FI = prep["wo_ff"].shape[1]
    kern = functools.partial(_fused_layers_kernel, heads=H, dim_head=dh,
                             dim_inner=DI, ff_inner=FI)

    def cspec(shape):           # constant across the whole grid
        return pl.BlockSpec(shape, lambda b, l: (0,) * len(shape))

    def lspec(shape):           # per-layer weight slab (streams over layer axis)
        return pl.BlockSpec((1,) + shape, lambda b, l: (l,) + (0,) * len(shape))

    return pl.pallas_call(
        kern,
        out_shape=jax.ShapeDtypeStruct((B, N, D), jnp.float32),
        grid=(B, depth),
        in_specs=[
            pl.BlockSpec((1, N, D), lambda b, l: (b, 0, 0)),  # tokens (read at l==0)
            cspec((2 * DI, 2 * H)),                           # q/k segment matrix
            cspec((2 * H, 2 * DI)),                           # its transpose
            lspec((D, 3 * DI)),                               # fused wqkv (bf16)
            lspec((1, 2 * DI)),                               # fused q/k scale
            lspec((DI, D)),                                   # wo_attn (bf16)
            lspec((1, D)),                                    # attn_alpha * scale
            lspec((D, 2 * FI)),                               # fused hidden/gate (bf16)
            lspec((1, 2 * FI)),                               # fused hidden/gate scales
            lspec((FI, D)),                                   # wo_ff (bf16)
            lspec((1, D)),                                    # ff_alpha * scale
        ],
        out_specs=pl.BlockSpec((1, N, D), lambda b, l: (b, 0, 0)),
        scratch_shapes=[pltpu.VMEM((N, D), jnp.float32)],     # resident token state
        compiler_params=pltpu.CompilerParams(
            dimension_semantics=("parallel", "arbitrary"),
            vmem_limit_bytes=_vmem_limit_bytes(),
        ),
    )(tokens, prep["seg2"], prep["seg2_t"], prep["wqkv"], prep["qk_scale"],
      prep["wo_attn"], prep["attn_alpha"], prep["whg"], prep["hg_scale"],
      prep["wo_ff"], prep["ff_alpha"])


# ---------------------------------------------------------------------------
# Parameter init (deterministic, in-script) and one-time weight preparation
# ---------------------------------------------------------------------------
def init_params(key, cfg):
    C, P, D = cfg["channels"], cfg["patch_size"], cfg["dim"]
    H, dh = cfg["heads"], cfg["dim_head"]
    depth, mlp = cfg["depth"], cfg["mlp_dim"]
    patch_dim = C * P * P
    DI = H * dh
    FI = int(mlp * 2 / 3)
    n_patches = (cfg["image_size"] // P) ** 2

    keys = iter(jax.random.split(key, 4 + depth * 8))

    def rnd(shape):
        return jax.random.normal(next(keys), shape, jnp.float32) * 0.02

    alpha_init = (1.0 / depth) / (D ** 0.5)
    params = {
        "w_embed": rnd((D, patch_dim)),          # NormLinear(patch_dim, dim), norm over axis 0
        "pos_emb": rnd((n_patches, D)),
        "layers": [],
    }
    for _ in range(depth):
        params["layers"].append({
            "wq": rnd((DI, D)),                  # norm over axis -1 (input dim)
            "wk": rnd((DI, D)),
            "wv": rnd((DI, D)),
            "wo_attn": rnd((D, DI)),             # norm over axis 0
            "q_scale": jnp.full((H, dh), dh ** 0.25, jnp.float32),
            "k_scale": jnp.full((H, dh), dh ** 0.25, jnp.float32),
            "attn_alpha": jnp.full((1, D), alpha_init, jnp.float32),
            "wh": rnd((FI, D)),                  # norm over axis -1
            "wg": rnd((FI, D)),
            "wo_ff": rnd((D, FI)),               # norm over axis 0
            "hidden_scale": jnp.ones((1, FI), jnp.float32),
            "gate_scale": jnp.ones((1, FI), jnp.float32),
            "ff_alpha": jnp.full((1, D), alpha_init, jnp.float32),
        })
    return params


def prepare_weights(params, cfg):
    """One-time prep: l2norm + transpose + bf16 cast, fuse/stack per-layer
    weights along a leading layer axis, and bake the sqrt(dim) scale into
    attn_alpha / ff_alpha / gate_scale."""
    H, dh, D = cfg["heads"], cfg["dim_head"], cfg["dim"]
    DI = H * dh
    scale = D ** 0.5

    # block-diagonal segment matrix covering q and k heads in one pass
    head_id = jnp.arange(2 * DI) // dh
    seg2 = (head_id[:, None] == jnp.arange(2 * H)[None, :]).astype(jnp.float32)

    wqkv, qk_scale, wo_attn, attn_alpha = [], [], [], []
    whg, hg_scale, wo_ff, ff_alpha = [], [], [], []
    for L in params["layers"]:
        wq = _l2norm(L["wq"], axis=-1).T
        wk = _l2norm(L["wk"], axis=-1).T
        wv = _l2norm(L["wv"], axis=-1).T
        wqkv.append(jnp.concatenate([wq, wk, wv], axis=1).astype(jnp.bfloat16))
        qk_scale.append(jnp.concatenate([L["q_scale"].reshape(1, DI),
                                         L["k_scale"].reshape(1, DI)], axis=1))
        wo_attn.append(_l2norm(L["wo_attn"], axis=0).T.astype(jnp.bfloat16))
        attn_alpha.append(L["attn_alpha"] * scale)
        wh = _l2norm(L["wh"], axis=-1).T
        wg = _l2norm(L["wg"], axis=-1).T
        whg.append(jnp.concatenate([wh, wg], axis=1).astype(jnp.bfloat16))
        hg_scale.append(jnp.concatenate([L["hidden_scale"],
                                         L["gate_scale"] * scale], axis=1))
        wo_ff.append(_l2norm(L["wo_ff"], axis=0).T.astype(jnp.bfloat16))
        ff_alpha.append(L["ff_alpha"] * scale)

    stack = lambda xs: jnp.stack(xs, axis=0)
    return {
        "w_embed_t": _l2norm(params["w_embed"], axis=0).T.astype(jnp.bfloat16),
        "pos_emb": params["pos_emb"],
        "seg2": seg2,
        "seg2_t": seg2.T,
        "wqkv": stack(wqkv), "qk_scale": stack(qk_scale),
        "wo_attn": stack(wo_attn), "attn_alpha": stack(attn_alpha),
        "whg": stack(whg), "hg_scale": stack(hg_scale),
        "wo_ff": stack(wo_ff), "ff_alpha": stack(ff_alpha),
    }


def nvit_forward(x, prep, cfg):
    B, C, Hi, Wi = x.shape
    P = cfg["patch_size"]
    hh, ww = Hi // P, Wi // P
    # 'b c (h p1) (w p2) -> b (h w) (c p1 p2)'  (pure layout glue, outside kernels)
    patches = x.reshape(B, C, hh, P, ww, P).transpose(0, 2, 4, 1, 3, 5)
    patches = patches.reshape(B, hh * ww, C * P * P)

    tokens = _embed_call(patches, prep["w_embed_t"], prep["pos_emb"])
    return _fused_layers_call(tokens, prep, cfg)


# ---------------------------------------------------------------------------
# Pure-JAX f32 reference (mirrors the PyTorch forward) for a sanity check
# ---------------------------------------------------------------------------
def ref_forward(x, params, cfg):
    B, C, Hi, Wi = x.shape
    P, D = cfg["patch_size"], cfg["dim"]
    Hh, dh = cfg["heads"], cfg["dim_head"]
    hh, ww = Hi // P, Wi // P
    patches = x.reshape(B, C, hh, P, ww, P).transpose(0, 2, 4, 1, 3, 5)
    patches = patches.reshape(B, hh * ww, C * P * P)

    w_e = _l2norm(params["w_embed"], axis=0)
    tokens = _l2norm(patches @ w_e.T + params["pos_emb"])
    scale = D ** 0.5
    N = tokens.shape[1]
    for L in params["layers"]:
        wq = _l2norm(L["wq"], axis=-1)
        wk = _l2norm(L["wk"], axis=-1)
        wv = _l2norm(L["wv"], axis=-1)
        wo = _l2norm(L["wo_attn"], axis=0)
        q = (tokens @ wq.T).reshape(B, N, Hh, dh).transpose(0, 2, 1, 3)
        k = (tokens @ wk.T).reshape(B, N, Hh, dh).transpose(0, 2, 1, 3)
        v = (tokens @ wv.T).reshape(B, N, Hh, dh).transpose(0, 2, 1, 3)
        q = _l2norm(q) * L["q_scale"][None, :, None, :]
        k = _l2norm(k) * L["k_scale"][None, :, None, :]
        s = jnp.einsum("bhnd,bhmd->bhnm", q, k)
        p = jax.nn.softmax(s, axis=-1)
        o = jnp.einsum("bhnm,bhmd->bhnd", p, v).transpose(0, 2, 1, 3).reshape(B, N, Hh * dh)
        attn_out = _l2norm(o @ wo.T)
        w = L["attn_alpha"][0] * scale
        tokens = _l2norm(tokens + w * (attn_out - tokens))

        wh = _l2norm(L["wh"], axis=-1)
        wg = _l2norm(L["wg"], axis=-1)
        wf = _l2norm(L["wo_ff"], axis=0)
        hidden = (tokens @ wh.T) * L["hidden_scale"][0]
        gate = (tokens @ wg.T) * L["gate_scale"][0] * scale
        hidden = jax.nn.silu(gate) * hidden
        ff_out = _l2norm(hidden @ wf.T)
        w = L["ff_alpha"][0] * scale
        tokens = _l2norm(tokens + w * (ff_out - tokens))
    return tokens


if __name__ == "__main__":
    # Lane-friendly toy config: dim, dim_head, FI are multiples of 128, so every
    # head slice / reshape / store in the kernel is whole-vreg aligned.
    cfg = dict(image_size=16, patch_size=4, channels=3, dim=128, depth=2,
               heads=2, dim_head=128, mlp_dim=192)
    key = jax.random.PRNGKey(0)
    kx, kp = jax.random.split(key)
    x = jax.random.normal(
        kx, (2, cfg["channels"], cfg["image_size"], cfg["image_size"]), jnp.float32)
    params = init_params(kp, cfg)
    prep = prepare_weights(params, cfg)

    out = nvit_forward(x, prep, cfg)
    out = jax.block_until_ready(out)

    n_patches = (cfg["image_size"] // cfg["patch_size"]) ** 2
    assert out.shape == (2, n_patches, cfg["dim"])

    ref = ref_forward(x, params, cfg)
    max_err = float(jnp.max(jnp.abs(out - ref)))
    # bf16 matmul operands (f32 accumulation) + approx reciprocal vs. pure-f32
    # reference; nViT's l2-normalization keeps the drift well inside 3e-2.
    assert max_err < 3e-2, f"mismatch vs reference: {max_err}"

    print("KERNEL_OK")
</pallas_src>

<mosaic_0001>
module attributes {stable_mosaic.version = 11 : i64} {
  func.func @_embed_kernel(%arg0: i32, %arg1: memref<1x16x48xf32, #tpu.memory_space<vmem>>, %arg2: memref<48x128xbf16, #tpu.memory_space<vmem>>, %arg3: memref<16x128xf32, #tpu.memory_space<vmem>>, %arg4: memref<1x16x128xf32, #tpu.memory_space<vmem>>) attributes {dimension_semantics = [#tpu.dimension_semantics<parallel>], iteration_bounds = array<i64: 2>, scalar_prefetch = 0 : i64, scratch_operands = 0 : i64, tpu.core_type = #tpu.core_type<tc>, window_params = [{transform_indices = @transform_0, window_bounds = array<i64: 1, 16, 48>}, {pipeline_mode = #tpu.pipeline_mode<synchronous>, transform_indices = @transform_1, window_bounds = array<i64: 48, 128>}, {pipeline_mode = #tpu.pipeline_mode<synchronous>, transform_indices = @transform_2, window_bounds = array<i64: 16, 128>}, {transform_indices = @transform_3, window_bounds = array<i64: 1, 16, 128>}]} {
    %c0 = arith.constant 0 : index
    %c0_0 = arith.constant 0 : index
    %c0_1 = arith.constant 0 : index
    %0 = vector.load %arg1[%c0, %c0_0, %c0_1] : memref<1x16x48xf32, #tpu.memory_space<vmem>>, vector<1x16x48xf32>
    %1 = vector.shape_cast %0 : vector<1x16x48xf32> to vector<16x48xf32>
    %2 = arith.truncf %1 : vector<16x48xf32> to vector<16x48xbf16>
    %c0_2 = arith.constant 0 : index
    %c0_3 = arith.constant 0 : index
    %3 = vector.load %arg2[%c0_2, %c0_3] : memref<48x128xbf16, #tpu.memory_space<vmem>>, vector<48x128xbf16>
    %cst = arith.constant dense<0.000000e+00> : vector<16x128xf32>
    %4 = tpu.matmul %2, %3, %cst {dimension_numbers = #tpu.dot_dimension_numbers<[1], [0], [0], [1], [0, 0, 1, 1], [], []>} : vector<16x48xbf16>, vector<48x128xbf16>, vector<16x128xf32> -> vector<16x128xf32>
    %c0_4 = arith.constant 0 : index
    %c0_5 = arith.constant 0 : index
    %5 = vector.load %arg3[%c0_4, %c0_5] : memref<16x128xf32, #tpu.memory_space<vmem>>, vector<16x128xf32>
    %6 = arith.addf %4, %5 : vector<16x128xf32>
    %7 = arith.mulf %6, %6 : vector<16x128xf32>
    %cst_6 = arith.constant dense<0.000000e+00> : vector<16xf32>
    %8 = vector.multi_reduction <add>, %7, %cst_6 [1] : vector<16x128xf32> to vector<16xf32>
    %9 = vector.shape_cast %8 : vector<16xf32> to vector<16x1xf32>
    %cst_7 = arith.constant 1.000000e-24 : f32
    %10 = vector.broadcast %cst_7 : f32 to vector<16x1xf32>
    %11 = arith.maximumf %9, %10 : vector<16x1xf32>
    %12 = math.rsqrt %11 : vector<16x1xf32>
    %13 = vector.broadcast %12 : vector<16x1xf32> to vector<16x128xf32>
    %14 = arith.mulf %6, %13 : vector<16x128xf32>
    %c0_8 = arith.constant 0 : index
    %c0_9 = arith.constant 0 : index
    %c0_10 = arith.constant 0 : index
    %15 = vector.load %arg4[%c0_8, %c0_9, %c0_10] : memref<1x16x128xf32, #tpu.memory_space<vmem>>, vector<1x16x128xf32>
    %16 = vector.shape_cast %15 : vector<1x16x128xf32> to vector<16x128xf32>
    %17 = vector.shape_cast %14 : vector<16x128xf32> to vector<1x16x128xf32>
    tpu.vector_store %arg4[%c0_8, %c0_9, %c0_10], %17 {strides = array<i32>} : memref<1x16x128xf32, #tpu.memory_space<vmem>>, vector<1x16x128xf32>,
    return
  }
  func.func @transform_0(%arg0: i32) -> (i32, i32, i32) {
    %c0_i32 = arith.constant 0 : i32
    %c0_i32_0 = arith.constant 0 : i32
    %c0_i32_1 = arith.constant 0 : i32
    return %arg0, %c0_i32, %c0_i32_0 : i32, i32, i32
  }
  func.func @transform_1(%arg0: i32) -> (i32, i32) {
    %c0_i32 = arith.constant 0 : i32
    %c0_i32_0 = arith.constant 0 : i32
    %c0_i32_1 = arith.constant 0 : i32
    return %c0_i32, %c0_i32_0 : i32, i32
  }
  func.func @transform_2(%arg0: i32) -> (i32, i32) {
    %c0_i32 = arith.constant 0 : i32
    %c0_i32_0 = arith.constant 0 : i32
    %c0_i32_1 = arith.constant 0 : i32
    return %c0_i32, %c0_i32_0 : i32, i32
  }
  func.func @transform_3(%arg0: i32) -> (i32, i32, i32) {
    %c0_i32 = arith.constant 0 : i32
    %c0_i32_0 = arith.constant 0 : i32
    %c0_i32_1 = arith.constant 0 : i32
    return %arg0, %c0_i32, %c0_i32_0 : i32, i32, i32
  }
}

</mosaic_0001>

<llo_original>
// kernel: tpu_custom_call.1
$region0: #{tpu_custom_call.1}
  #allocation0 [shape = 'u32[]', space=smem, size = 0x4, offset = 0x4, fixed_abs, tag = 'smem constant byte address 0x4 - core index']
  #allocation1 [shape = 'u32[144,128]{1,0:T(1,128)}', space=vmem, size = 0x12000, scoped, tag = 'internal scratch']
  %s0 = inlined_call_operand.hbm [shape: f32[2,16,48], index: 0, kind: input, shape index: {}]
  %s1 = inlined_call_operand.hbm [shape: bf16[48,128], index: 1, kind: input, shape index: {}]
  %s2 = inlined_call_operand.hbm [shape: f32[16,128], index: 2, kind: input, shape index: {}]
  %s3 = inlined_call_operand.hbm [shape: f32[2,16,128], index: 3, kind: output, shape index: {}]
  %s4 = sld [smem:[#allocation0]]
  $region57: #{tpu_custom_call.1} parent=0
    _
  %s6 = ssub.s32 1, %s4
  %s7 = scalar_select 0, %s6, %s4
  $region1: #{tpu_custom_call.1} parent=0
    #allocation2 [shape = 'u8[16384]{0}', space=vmem, size = 0x4000, scoped, tag = 'input window, operand 0']
    #allocation3 [shape = 's32[2]{0}', space=sflag, size = 0x8, scoped, tag = 'scoped memory for tpu_custom_call.1']
    #allocation4 [shape = 's32[2]{0}', space=sflag, size = 0x8, scoped, tag = 'scoped memory for tpu_custom_call.1']
    #allocation5 [shape = 'u8[12288]{0}', space=vmem, size = 0x3000, scoped, tag = 'input window, operand 1, single buffered']
    #allocation6 [shape = 's32[1]{0}', space=sflag, size = 0x4, scoped, tag = 'scoped memory for tpu_custom_call.1']
    #allocation7 [shape = 'u8[8192]{0}', space=vmem, size = 0x2000, scoped, tag = 'input window, operand 2, single buffered']
    #allocation8 [shape = 'u8[16384]{0}', space=vmem, size = 0x4000, scoped, tag = 'output window, operand 0']
    %8 = vsyncpa [#allocation3], 0
    %s9 = scalar_lea.sflag [#allocation3], 1
    %10 = vsyncpa %s9, 0
    %11 = vsyncpa [#allocation6], 0
    %12 = vsyncpa [#allocation4], 0
    %s13 = scalar_lea.sflag [#allocation4], 1
    %14 = vsyncpa %s13, 0
    loop: start=0, step=1, limit=4
    $region2: #{tpu_custom_call.1} parent=1 // loop_pre_header
      _
    $region3: #{tpu_custom_call.1} parent=1 // loop_header
      %s16 = sphi 0, %s20
      %p17 = scmp.ge.s32.totalorder %s16, 4
      %s26 = sphi 0, %s28
      %s29 = sphi 0, %s26
      %s30 = sphi 0, %s29
      %s46 = sphi 0, %s30
      %s50 = sphi 0, %s50
      %s52 = sphi 0, %s50
      %s53 = sphi 0, %s52
      %s67 = sphi 0, %s53
      %s71 = sphi 0, %s71
      %s73 = sphi 0, %s71
      %s74 = sphi 0, %s73
      %s88 = sphi 0, %s74
      %s94 = sphi 0, %s96
      %s97 = sphi 0, %s94
      %s98 = sphi 0, %s97
      %s114 = sphi 0, %s98
    $region4: #{tpu_custom_call.1} parent=1 // loop_header_branch
      %19 = sbr.rel (%p17) target = $region8
    $region5: #{tpu_custom_call.1} parent=1 // loop_body
      %s21 = ssub.s32 %s16, 1
      %s22 = ssub.s32 %s16, 2
      %s23 = sadd.s32 %s16, 1
      %s24 = ssub.s32 %s16, %s23
      %p25 = scmp.eq.s32.totalorder %s24, 0
      %s27 = sadd.s32 %s26, 1
      %s28 = scalar_select %p25, %s26, %s27
      %p31 = pneg %p25
      %p32 = scmp.eq.s32.totalorder %s16, 1
      %p33 = por %p31, %p32
      %p34 = scmp.ne.s32.totalorder %s26, %s29
      %p35 = scmp.eq.s32.totalorder %s16, 0
      %p36 = por %p34, %p35
      %p37 = scmp.ne.s32.totalorder %s26, %s29
      %p38 = scmp.eq.s32.totalorder %s21, 1
      %p39 = por %p37, %p38
      %p40 = scmp.ne.s32.totalorder %s29, %s30
      %p41 = scmp.eq.s32.totalorder %s21, 0
      %p42 = por %p40, %p41
      %p43 = scmp.ne.s32.totalorder %s29, %s30
      %p44 = scmp.eq.s32.totalorder %s22, 1
      %p45 = por %p43, %p44
      %p47 = scmp.ne.s32.totalorder %s30, %s46
      %p48 = scmp.eq.s32.totalorder %s22, 0
      %p49 = por %p47, %p48
      %s51 = sadd.s32 %s50, 1
      %p54 = scmp.eq.s32.totalorder %s16, 1
      %p55 = scmp.ne.s32.totalorder %s50, %s52
      %p56 = scmp.eq.s32.totalorder %s16, 0
      %p57 = por %p55, %p56
      %p58 = scmp.ne.s32.totalorder %s50, %s52
      %p59 = scmp.eq.s32.totalorder %s21, 1
      %p60 = por %p58, %p59
      %p61 = scmp.ne.s32.totalorder %s52, %s53
      %p62 = scmp.eq.s32.totalorder %s21, 0
      %p63 = por %p61, %p62
      %p64 = scmp.ne.s32.totalorder %s52, %s53
      %p65 = scmp.eq.s32.totalorder %s22, 1
      %p66 = por %p64, %p65
      %p68 = scmp.ne.s32.totalorder %s53, %s67
      %p69 = scmp.eq.s32.totalorder %s22, 0
      %p70 = por %p68, %p69
      %s72 = sadd.s32 %s71, 1
      %p75 = scmp.eq.s32.totalorder %s16, 1
      %p76 = scmp.ne.s32.totalorder %s71, %s73
      %p77 = scmp.eq.s32.totalorder %s16, 0
      %p78 = por %p76, %p77
      %p79 = scmp.ne.s32.totalorder %s71, %s73
      %p80 = scmp.eq.s32.totalorder %s21, 1
      %p81 = por %p79, %p80
      %p82 = scmp.ne.s32.totalorder %s73, %s74
      %p83 = scmp.eq.s32.totalorder %s21, 0
      %p84 = por %p82, %p83
      %p85 = scmp.ne.s32.totalorder %s73, %s74
      %p86 = scmp.eq.s32.totalorder %s22, 1
      %p87 = por %p85, %p86
      %p89 = scmp.ne.s32.totalorder %s74, %s88
      %p90 = scmp.eq.s32.totalorder %s22, 0
      %p91 = por %p89, %p90
      %s92 = ssub.s32 %s16, %s23
      %p93 = scmp.eq.s32.totalorder %s92, 0
      %s95 = sadd.s32 %s94, 1
      %s96 = scalar_select %p93, %s94, %s95
      %p99 = pneg %p93
      %p100 = scmp.eq.s32.totalorder %s16, 1
      %p101 = por %p99, %p100
      %p102 = scmp.ne.s32.totalorder %s94, %s97
      %p103 = scmp.eq.s32.totalorder %s16, 0
      %p104 = por %p102, %p103
      %p105 = scmp.ne.s32.totalorder %s94, %s97
      %p106 = scmp.eq.s32.totalorder %s21, 1
      %p107 = por %p105, %p106
      %p108 = scmp.ne.s32.totalorder %s97, %s98
      %p109 = scmp.eq.s32.totalorder %s21, 0
      %p110 = por %p108, %p109
      %p111 = scmp.ne.s32.totalorder %s97, %s98
      %p112 = scmp.eq.s32.totalorder %s22, 1
      %p113 = por %p111, %p112
      %p115 = scmp.ne.s32.totalorder %s98, %s114
      %p116 = scmp.eq.s32.totalorder %s22, 0
      %p117 = por %p115, %p116
      %p118 = scmp.le.s32.totalorder 1, %s16
      %p119 = scmp.lt.s32.totalorder %s16, 3
      %p120 = pnand %p118, %p119
      %p121 = pneg %p120
      // Predicated region
      $region9: #{tpu_custom_call.1} parent=5 // pred_check
        _
      $region10: #{tpu_custom_call.1} parent=5 // pred_check_branch
        %123 = sbr.rel (%p120) target = $region12
      $region11: #{tpu_custom_call.1} parent=5 // pred_region
        %s124 = ssub.s32 %s16, 1
        // Predicated region
        $region13: #{tpu_custom_call.1} parent=11 // pred_check
          %p125 = pneg %p63
        $region14: #{tpu_custom_call.1} parent=11 // pred_check_branch
          %127 = sbr.rel (%p125) target = $region16
        $region15: #{tpu_custom_call.1} parent=11 // pred_region
          %s129 = ssub.s32 384, 384
          %130 = vsyncadd [#allocation6], %s129
          %s131 = sshll.u32 [#allocation5], 4
          %s132 = int_to_ptr.vmem [resolvable:$true] %s131
          %137 = dma.hbm_to_vmem [thread:$0]  %s1, 384, %s132, [#allocation6], 64, 64, 4
        $region16: #{tpu_custom_call.1} parent=11 // pred_fallthru
          _
        // Predicated region
        $region17: #{tpu_custom_call.1} parent=11 // pred_check
          %p138 = pneg %p84
        $region18: #{tpu_custom_call.1} parent=11 // pred_check_branch
          %140 = sbr.rel (%p138) target = $region20
        $region19: #{tpu_custom_call.1} parent=11 // pred_region
          %s142 = ssub.s32 256, 256
          %143 = vsyncadd [#allocation6], %s142
          %s144 = sshll.u32 [#allocation7], 4
          %s145 = int_to_ptr.vmem [resolvable:$true] %s144
          %150 = dma.hbm_to_vmem [thread:$0]  %s2, 256, %s145, [#allocation6], 128, 128, 8
        $region20: #{tpu_custom_call.1} parent=11 // pred_fallthru
          _
      $region12: #{tpu_custom_call.1} parent=5 // pred_fallthru
        _
      %p151 = scmp.lt.s32.totalorder %s16, 2
      // Predicated region
      $region21: #{tpu_custom_call.1} parent=5 // pred_check
        %p152 = pneg %p151
      $region22: #{tpu_custom_call.1} parent=5 // pred_check_branch
        %154 = sbr.rel (%p152) target = $region24
      $region23: #{tpu_custom_call.1} parent=5 // pred_region
        // Predicated region
        $region25: #{tpu_custom_call.1} parent=23 // pred_check
          %p155 = pneg %p36
        $region26: #{tpu_custom_call.1} parent=23 // pred_check_branch
          %157 = sbr.rel (%p155) target = $region28
        $region27: #{tpu_custom_call.1} parent=23 // pred_region
          %s158 = sand.u32 %s26, 1
          %s159 = scalar_lea.sflag [#allocation3], %s158
          %s160 = sand.u32 %s26, 1
          %s161 = smul.addr %s160, 16
          %s162 = scalar_lea.vmem [#allocation2], %s161
          %s164 = ssub.s32 256, 256
          %165 = vsyncadd %s159, %s164
          %s166 = smul.addr %s16, 2
          %s167 = smul.addr %s166, 128
          %s168 = scalar_lea.hbm %s0, %s167
          %s169 = sshll.u32 %s162, 4
          %s170 = int_to_ptr.vmem [resolvable:$true] %s169
          %175 = dma.hbm_to_vmem [thread:$0]  %s168, 256, %s170, %s159, 128, 128, 8
        $region28: #{tpu_custom_call.1} parent=23 // pred_fallthru
          _
      $region24: #{tpu_custom_call.1} parent=5 // pred_fallthru
        _
      %p176 = scmp.le.s32.totalorder 1, %s16
      %p177 = scmp.lt.s32.totalorder %s16, 3
      %p178 = pnand %p176, %p177
      %p179 = pneg %p178
      // Predicated region
      $region29: #{tpu_custom_call.1} parent=5 // pred_check
        _
      $region30: #{tpu_custom_call.1} parent=5 // pred_check_branch
        %181 = sbr.rel (%p178) target = $region32
      $region31: #{tpu_custom_call.1} parent=5 // pred_region
        %s182 = ssub.s32 %s16, 1
        %s183 = sand.u32 %s29, 1
        %s184 = scalar_lea.sflag [#allocation3], %s183
        %s185 = sand.u32 %s29, 1
        %s186 = smul.addr %s185, 16
        %s187 = scalar_lea.vmem [#allocation2], %s186
        // Predicated region
        $region33: #{tpu_custom_call.1} parent=31 // pred_check
          %p188 = pneg %p42
        $region34: #{tpu_custom_call.1} parent=31 // pred_check_branch
          %190 = sbr.rel (%p188) target = $region36
        $region35: #{tpu_custom_call.1} parent=31 // pred_region
          %191 = dma.done %s184, 256
        $region36: #{tpu_custom_call.1} parent=31 // pred_fallthru
          _
        // Predicated region
        $region37: #{tpu_custom_call.1} parent=31 // pred_check
          %p192 = pneg %p63
        $region38: #{tpu_custom_call.1} parent=31 // pred_check_branch
          %194 = sbr.rel (%p192) target = $region40
        $region39: #{tpu_custom_call.1} parent=31 // pred_region
          %195 = dma.done [#allocation6], 384
        $region40: #{tpu_custom_call.1} parent=31 // pred_fallthru
          _
        // Predicated region
        $region41: #{tpu_custom_call.1} parent=31 // pred_check
          %p196 = pneg %p84
        $region42: #{tpu_custom_call.1} parent=31 // pred_check_branch
          %198 = sbr.rel (%p196) target = $region44
        $region43: #{tpu_custom_call.1} parent=31 // pred_region
          %199 = dma.done [#allocation6], 256
        $region44: #{tpu_custom_call.1} parent=31 // pred_fallthru
          _
        %s200 = sand.u32 %s29, 1
        %s201 = scalar_lea.sflag [#allocation3], %s200
        %s202 = sand.u32 %s29, 1
        %s203 = smul.addr %s202, 16
        %s204 = scalar_lea.vmem [#allocation2], %s203
        %p205 = pneg %p42
        %p206 = pneg %p39
        %p207 = pneg %p63
        %p208 = pneg %p60
        %p209 = pneg %p84
        %p210 = pneg %p81
        %p211 = pneg %p110
        %p212 = pneg %p107
        %s213 = sand.u32 %s97, 1
        %s214 = scalar_lea.sflag [#allocation4], %s213
        %s215 = sand.u32 %s97, 1
        %s216 = smul.addr %s215, 16
        %s217 = scalar_lea.vmem [#allocation8], %s216
        %v219 = vld [vmem:[%s187] sm:$0xff]
        %v220 = vld [vmem:[%s187 + $0x8] sm:$0xff]
        %v221 = vpack.c.bf16 %v220, %v219
        %v222 = vld [vmem:[#allocation5] sm:$0xf]
        %v223 = vld [vmem:[#allocation5 + $0x4] sm:$0xf]
        %v224 = vld [vmem:[#allocation5 + $0x8] sm:$0xf]
        %v225 = vld [vmem:[#allocation5 + $0xc] sm:$0xf]
        %v226 = vld [vmem:[#allocation5 + $0x10] sm:$0xf]
        %v227 = vld [vmem:[#allocation5 + $0x14] sm:$0xf]
        %v228 = vld [vmem:[#allocation7] sm:$0xff]
        %v229 = vld [vmem:[#allocation7 + $0x8] sm:$0xff]
        %v236 = vunpack.c.l.b16 %v222
        %v237 = vunpack.c.l.b16 %v223
        %v238 = vunpack.c.l.b16 %v224
        %v239 = vunpack.c.l.b16 %v225
        %v240 = vunpack.c.l.b16 %v226
        %v241 = vunpack.c.l.b16 %v227
        %v242 = vpack.c.b16 %v237, %v236
        %v243 = vpack.c.b16 %v239, %v238
        %v244 = vpack.c.b16 %v241, %v240
        %vm248 = vcmask 392192
        %v250 = vsel %vm248, %v221, 0
        %252 = vmatprep.subr.bf16.mxu0 0
        %253 = vmatpush1.bf16.msra.mxu0 0
        %254 = vmatprep.subr.bf16.mxu0 0
        %255 = vmatpush1.bf16.msra.mxu0 0
        %256 = vmatprep.subr.bf16.mxu0 0
        %257 = vmatpush1.bf16.msra.mxu0 0
        %258 = vmatprep.subr.bf16.mxu0 0
        %259 = vmatpush1.bf16.msra.mxu0 0
        %260 = vmatprep.subr.bf16.mxu0 0
        %261 = vmatpush1.bf16.msra.mxu0 0
        %262 = vmatprep.subr.bf16.mxu0 0
        %263 = vmatpush1.bf16.msra.mxu0 %v244
        %264 = vmatprep.subr.bf16.mxu0 0
        %265 = vmatpush1.bf16.msra.mxu0 %v243
        %266 = vmatprep.subr.bf16.mxu0 0
        %267 = vmatpush1.bf16.msra.mxu0 %v242
        %268 = vmatprep.subr.bf16.mxu0 0
        %269 = vmatpush2.bf16.msra.mxu0 0
        %270 = vmatprep.subr.bf16.mxu0 0
        %271 = vmatpush2.bf16.msra.mxu0 0
        %272 = vmatprep.subr.bf16.mxu0 0
        %273 = vmatpush2.bf16.msra.mxu0 0
        %274 = vmatprep.subr.bf16.mxu0 0
        %275 = vmatpush2.bf16.msra.mxu0 0
        %276 = vmatprep.subr.bf16.mxu0 0
        %277 = vmatpush2.bf16.msra.mxu0 0
        %278 = vmatprep.subr.bf16.mxu0 0
        %279 = vmatpush2.bf16.msra.mxu0 0
        %280 = vmatprep.subr.bf16.mxu0 0
        %281 = vmatpush2.bf16.msra.mxu0 0
        %282 = vmatprep.subr.bf16.mxu0 0
        %283 = vmatpush2.bf16.msra.mxu0 0
        %284 = vmatprep.mubr.bf16.mxu0 0
        %285 = vmatmul.mubr.bf16.gmra.mxu0 %v250
        %v286 = vpop.f32.mrf.mxu0
        %v287 = vadd.f32 %v228, %v286
        %v288 = vpop.f32.mrf.mxu0
        %v289 = vpop.f32.mrf.mxu0
        %v290 = vadd.f32 %v229, %v289
        %v291 = vpop.f32.mrf.mxu0
        %292 = vdwg.mxu0
        %v293 = vmul.f32 %v287, %v287
        %v294 = vmul.f32 %v290, %v290
        %295 = vadd.xlane.f32.xlu0 %v293
        %v296 = vpop.xlane.xlu0 %295
        %297 = vadd.xlane.f32.xlu0 %v294
        %v298 = vpop.xlane.xlu0 %297
        %v299 = vmax.f32 %v296, 1e-24
        %v300 = vmax.f32 %v298, 1e-24
        %v301 = vrsqrt.pop %v299
        %v302 = vrsqrt.pop %v300
        %v303 = vmul.f32 %v287, %v301
        %v304 = vmul.f32 %v290, %v302
        %305 = vst [vmem:[%s217] sm:$0xff] %v303
        %306 = vst [vmem:[%s217 + $0x8] sm:$0xff] %v304
        %s307 = sand.u32 %s97, 1
        %s308 = scalar_lea.sflag [#allocation4], %s307
        %s309 = sand.u32 %s97, 1
        %s310 = smul.addr %s309, 16
        %s311 = scalar_lea.vmem [#allocation8], %s310
        // Predicated region
        $region45: #{tpu_custom_call.1} parent=31 // pred_check
          %p312 = pneg %p107
        $region46: #{tpu_custom_call.1} parent=31 // pred_check_branch
          %314 = sbr.rel (%p312) target = $region48
        $region47: #{tpu_custom_call.1} parent=31 // pred_region
          %s316 = ssub.s32 256, 256
          %317 = vsyncadd %s308, %s316
          %s318 = smul.addr %s21, 2
          %s319 = smul.addr %s318, 128
          %s320 = scalar_lea.hbm %s3, %s319
          %s321 = sshll.u32 %s311, 4
          %s322 = int_to_ptr.vmem [resolvable:$true] %s321
          %327 = dma.vmem_to_hbm [thread:$0]  %s322, 256, %s320, %s308, 128, 128, 8
        $region48: #{tpu_custom_call.1} parent=31 // pred_fallthru
          _
      $region32: #{tpu_custom_call.1} parent=5 // pred_fallthru
        _
      %p328 = scmp.le.s32.totalorder 2, %s16
      // Predicated region
      $region49: #{tpu_custom_call.1} parent=5 // pred_check
        %p329 = pneg %p328
      $region50: #{tpu_custom_call.1} parent=5 // pred_check_branch
        %331 = sbr.rel (%p329) target = $region52
      $region51: #{tpu_custom_call.1} parent=5 // pred_region
        %s332 = ssub.s32 %s16, 2
        // Predicated region
        $region53: #{tpu_custom_call.1} parent=51 // pred_check
          %p333 = pneg %p113
        $region54: #{tpu_custom_call.1} parent=51 // pred_check_branch
          %335 = sbr.rel (%p333) target = $region56
        $region55: #{tpu_custom_call.1} parent=51 // pred_region
          %s336 = sand.u32 %s98, 1
          %s337 = scalar_lea.sflag [#allocation4], %s336
          %s338 = sand.u32 %s98, 1
          %s339 = smul.addr %s338, 16
          %s340 = scalar_lea.vmem [#allocation8], %s339
          %341 = dma.done %s337, 256
        $region56: #{tpu_custom_call.1} parent=51 // pred_fallthru
          _
      $region52: #{tpu_custom_call.1} parent=5 // pred_fallthru
        _
    $region6: #{tpu_custom_call.1} parent=1 // loop_footer
      %s20 = sadd.s32 1, %s16
    $region7: #{tpu_custom_call.1} parent=1 // loop_footer_branch
      %15 = sbr.rel target = $region3
    $region8: #{tpu_custom_call.1} parent=1 // loop_exit
      _
    %342 = vsyncpa [#allocation3], 1
    %s343 = scalar_lea.sflag [#allocation3], 1
    %344 = vsyncpa %s343, 1
    %345 = vsyncpa [#allocation6], 1
    %346 = vsyncpa [#allocation4], 1
    %s347 = scalar_lea.sflag [#allocation4], 1
    %348 = vsyncpa %s347, 1

</llo_original>
